<compile_context>
chip_gen: v5e
topology: v5e:2x2
jax: 0.10.0
libtpu: 0.0.40
codegen_flags: <defaults>
</compile_context>

<pallas_src>
import functools

import jax
import jax.numpy as jnp
from jax.experimental import pallas as pl
from jax.experimental.pallas import tpu as pltpu


def _round_up(x, m):
    return ((x + m - 1) // m) * m


def mlp_g_kernel(z_ref, w1_ref, b1_ref, w2_ref, b2_ref, w3_ref, b3_ref, o_ref):
    # Layer 1: Linear + ReLU (z_dim -> f_dim).  The operand cast to the weight
    # dtype happens here (free, hidden under the MXU op); accumulation is f32
    # and the bias-add / ReLU epilogue stays f32 (v5e VPU has no bf16).
    z = z_ref[...].astype(w1_ref.dtype)
    h = jnp.dot(z, w1_ref[...], preferred_element_type=jnp.float32)
    h = jnp.maximum(h + b1_ref[...].astype(jnp.float32), 0.0)

    # Layer 2: Linear + ReLU (f_dim -> f_dim).
    h = jnp.dot(h.astype(w2_ref.dtype), w2_ref[...],
                preferred_element_type=jnp.float32)
    h = jnp.maximum(h + b2_ref[...].astype(jnp.float32), 0.0)

    # Layer 3: Linear (f_dim -> x_dim).  x_dim is the true output width; the
    # store is a (cheap) masked vst but the HBM writeback is only x_dim lanes.
    out = jnp.dot(h.astype(w3_ref.dtype), w3_ref[...],
                  preferred_element_type=jnp.float32)
    out = out + b3_ref[...].astype(jnp.float32)
    o_ref[...] = out.astype(o_ref.dtype)


@functools.partial(jax.jit, static_argnames=("block_b", "compute_dtype"))
def mlp_g_forward(z, w1, b1, w2, b2, w3, b3, *, block_b=None, compute_dtype=None):
    out_dtype = z.dtype
    B, z_dim = z.shape
    f_dim = w1.shape[1]
    x_dim = w3.shape[1]

    # Optional low-precision operands (bf16 on v6e/v7x fast path).  Only the
    # tiny weights are pre-cast; z is cast inside the kernel so the wrapper
    # adds no extra HBM pass over the dominant input.  Biases stay f32.
    if compute_dtype is not None:
        w1, w2, w3 = (w.astype(compute_dtype) for w in (w1, w2, w3))

    # Batch tile: >= 2 grid steps whenever B > 8 (keeps both v7x TensorCores
    # busy; negligible ~0.35 us/step cost on the serial-grid v5e/v6e), capped
    # at 2048 rows so double-buffered tiles stay well inside scoped VMEM.
    if block_b is None:
        if B <= 8:
            block_b = B
        else:
            block_b = min(2048, _round_up(-(-B // 2), 8))

    grid = (pl.cdiv(B, block_b),)

    in_specs = [
        pl.BlockSpec((block_b, z_dim), lambda i: (i, 0)),   # z tile (batch only)
        pl.BlockSpec((z_dim, f_dim), lambda i: (0, 0)),     # w1 (grid-invariant)
        pl.BlockSpec((1, f_dim), lambda i: (0, 0)),         # b1
        pl.BlockSpec((f_dim, f_dim), lambda i: (0, 0)),     # w2
        pl.BlockSpec((1, f_dim), lambda i: (0, 0)),         # b2
        pl.BlockSpec((f_dim, x_dim), lambda i: (0, 0)),     # w3
        pl.BlockSpec((1, x_dim), lambda i: (0, 0)),         # b3
    ]
    out_specs = pl.BlockSpec((block_b, x_dim), lambda i: (i, 0))

    out = pl.pallas_call(
        mlp_g_kernel,
        out_shape=jax.ShapeDtypeStruct((B, x_dim), out_dtype),
        grid_spec=pltpu.PrefetchScalarGridSpec(
            num_scalar_prefetch=0,
            grid=grid,
            in_specs=in_specs,
            out_specs=out_specs,
        ),
        compiler_params=pltpu.CompilerParams(
            dimension_semantics=("parallel",),  # batch tiles -> v7x's 2 TCs
        ),
    )(z, w1, b1, w2, b2, w3, b3)

    # Matches PyTorch's out.view(out.size(0), -1): already (B, x_dim), no copy.
    return out


def init_params(key, z_dim=256, f_dim=128, x_dim=2, dtype=jnp.float32):
    """Deterministic PyTorch-Linear-style init: U(-1/sqrt(fan_in), 1/sqrt(fan_in))."""
    keys = jax.random.split(key, 6)

    def uniform(k, shape, fan_in):
        bound = 1.0 / jnp.sqrt(fan_in)
        return jax.random.uniform(k, shape, dtype, minval=-bound, maxval=bound)

    w1 = uniform(keys[0], (z_dim, f_dim), z_dim)
    b1 = uniform(keys[1], (1, f_dim), z_dim)
    w2 = uniform(keys[2], (f_dim, f_dim), f_dim)
    b2 = uniform(keys[3], (1, f_dim), f_dim)
    w3 = uniform(keys[4], (f_dim, x_dim), f_dim)
    b3 = uniform(keys[5], (1, x_dim), f_dim)
    return w1, b1, w2, b2, w3, b3


def mlp_g_reference(z, w1, b1, w2, b2, w3, b3):
    h = jnp.maximum(z @ w1 + b1, 0.0)
    h = jnp.maximum(h @ w2 + b2, 0.0)
    out = h @ w3 + b3
    return out.reshape(out.shape[0], -1)


if __name__ == "__main__":
    key = jax.random.PRNGKey(0)
    k_z, k_p = jax.random.split(key)

    B, z_dim, f_dim, x_dim = 16, 256, 128, 2
    z = jax.random.normal(k_z, (B, z_dim), jnp.float32)
    params = init_params(k_p, z_dim=z_dim, f_dim=f_dim, x_dim=x_dim)

    ref = mlp_g_reference(z, *params)

    # Full-precision path (two 8-row grid steps for this tiny batch).
    out = jax.block_until_ready(mlp_g_forward(z, *params))
    assert out.shape == (B, x_dim)
    assert jnp.allclose(out, ref, atol=1e-5, rtol=1e-5), "f32 mismatch vs reference"

    # bf16 weights + in-kernel z cast + f32 accumulation (v6e/v7x MXU fast path).
    out_bf16 = jax.block_until_ready(
        mlp_g_forward(z, *params, compute_dtype=jnp.bfloat16))
    assert out_bf16.shape == (B, x_dim)
    assert jnp.allclose(out_bf16, ref, atol=5e-2, rtol=5e-2), "bf16 mismatch vs reference"

    # Non-divisible batch (exercises the partial last tile / masked writeback).
    out_odd = jax.block_until_ready(mlp_g_forward(z[:11], *params))
    assert out_odd.shape == (11, x_dim)
    assert jnp.allclose(out_odd, ref[:11], atol=1e-5, rtol=1e-5), "ragged-B mismatch"

    print("KERNEL_OK")
</pallas_src>

<mosaic_0001>
module attributes {stable_mosaic.version = 11 : i64} {
  func.func @mlp_g_kernel(%arg0: i32, %arg1: memref<8x256xf32, #tpu.memory_space<vmem>>, %arg2: memref<256x128xf32, #tpu.memory_space<vmem>>, %arg3: memref<1x128xf32, #tpu.memory_space<vmem>>, %arg4: memref<128x128xf32, #tpu.memory_space<vmem>>, %arg5: memref<1x128xf32, #tpu.memory_space<vmem>>, %arg6: memref<128x2xf32, #tpu.memory_space<vmem>>, %arg7: memref<1x2xf32, #tpu.memory_space<vmem>>, %arg8: memref<8x2xf32, #tpu.memory_space<vmem>>) attributes {dimension_semantics = [#tpu.dimension_semantics<parallel>], iteration_bounds = array<i64: 2>, scalar_prefetch = 0 : i64, scratch_operands = 0 : i64, tpu.core_type = #tpu.core_type<tc>, window_params = [{transform_indices = @transform_0, window_bounds = array<i64: 8, 256>}, {pipeline_mode = #tpu.pipeline_mode<synchronous>, transform_indices = @transform_1, window_bounds = array<i64: 256, 128>}, {pipeline_mode = #tpu.pipeline_mode<synchronous>, transform_indices = @transform_2, window_bounds = array<i64: 1, 128>}, {pipeline_mode = #tpu.pipeline_mode<synchronous>, transform_indices = @transform_3, window_bounds = array<i64: 128, 128>}, {pipeline_mode = #tpu.pipeline_mode<synchronous>, transform_indices = @transform_4, window_bounds = array<i64: 1, 128>}, {pipeline_mode = #tpu.pipeline_mode<synchronous>, transform_indices = @transform_5, window_bounds = array<i64: 128, 2>}, {pipeline_mode = #tpu.pipeline_mode<synchronous>, transform_indices = @transform_6, window_bounds = array<i64: 1, 2>}, {transform_indices = @transform_7, window_bounds = array<i64: 8, 2>}]} {
    %c0 = arith.constant 0 : index
    %c0_0 = arith.constant 0 : index
    %0 = vector.load %arg1[%c0, %c0_0] : memref<8x256xf32, #tpu.memory_space<vmem>>, vector<8x256xf32>
    %c0_1 = arith.constant 0 : index
    %c0_2 = arith.constant 0 : index
    %1 = vector.load %arg2[%c0_1, %c0_2] : memref<256x128xf32, #tpu.memory_space<vmem>>, vector<256x128xf32>
    %cst = arith.constant dense<0.000000e+00> : vector<8x128xf32>
    %2 = tpu.matmul %0, %1, %cst {dimension_numbers = #tpu.dot_dimension_numbers<[1], [0], [0], [1], [0, 0, 1, 1], [], []>} : vector<8x256xf32>, vector<256x128xf32>, vector<8x128xf32> -> vector<8x128xf32>
    %c0_3 = arith.constant 0 : index
    %c0_4 = arith.constant 0 : index
    %3 = vector.load %arg3[%c0_3, %c0_4] : memref<1x128xf32, #tpu.memory_space<vmem>>, vector<1x128xf32>
    %4 = vector.broadcast %3 : vector<1x128xf32> to vector<8x128xf32>
    %5 = arith.addf %2, %4 : vector<8x128xf32>
    %cst_5 = arith.constant 0.000000e+00 : f32
    %6 = vector.broadcast %cst_5 : f32 to vector<8x128xf32>
    %7 = arith.maximumf %5, %6 : vector<8x128xf32>
    %c0_6 = arith.constant 0 : index
    %c0_7 = arith.constant 0 : index
    %8 = vector.load %arg4[%c0_6, %c0_7] : memref<128x128xf32, #tpu.memory_space<vmem>>, vector<128x128xf32>
    %cst_8 = arith.constant dense<0.000000e+00> : vector<8x128xf32>
    %9 = tpu.matmul %7, %8, %cst_8 {dimension_numbers = #tpu.dot_dimension_numbers<[1], [0], [0], [1], [0, 0, 1, 1], [], []>} : vector<8x128xf32>, vector<128x128xf32>, vector<8x128xf32> -> vector<8x128xf32>
    %c0_9 = arith.constant 0 : index
    %c0_10 = arith.constant 0 : index
    %10 = vector.load %arg5[%c0_9, %c0_10] : memref<1x128xf32, #tpu.memory_space<vmem>>, vector<1x128xf32>
    %11 = vector.broadcast %10 : vector<1x128xf32> to vector<8x128xf32>
    %12 = arith.addf %9, %11 : vector<8x128xf32>
    %cst_11 = arith.constant 0.000000e+00 : f32
    %13 = vector.broadcast %cst_11 : f32 to vector<8x128xf32>
    %14 = arith.maximumf %12, %13 : vector<8x128xf32>
    %c0_12 = arith.constant 0 : index
    %c0_13 = arith.constant 0 : index
    %15 = vector.load %arg6[%c0_12, %c0_13] : memref<128x2xf32, #tpu.memory_space<vmem>>, vector<128x2xf32>
    %cst_14 = arith.constant dense<0.000000e+00> : vector<8x2xf32>
    %16 = tpu.matmul %14, %15, %cst_14 {dimension_numbers = #tpu.dot_dimension_numbers<[1], [0], [0], [1], [0, 0, 1, 1], [], []>} : vector<8x128xf32>, vector<128x2xf32>, vector<8x2xf32> -> vector<8x2xf32>
    %c0_15 = arith.constant 0 : index
    %c0_16 = arith.constant 0 : index
    %17 = vector.load %arg7[%c0_15, %c0_16] : memref<1x2xf32, #tpu.memory_space<vmem>>, vector<1x2xf32>
    %18 = vector.broadcast %17 : vector<1x2xf32> to vector<8x2xf32>
    %19 = arith.addf %16, %18 : vector<8x2xf32>
    %c0_17 = arith.constant 0 : index
    %c0_18 = arith.constant 0 : index
    %20 = vector.load %arg8[%c0_17, %c0_18] : memref<8x2xf32, #tpu.memory_space<vmem>>, vector<8x2xf32>
    tpu.vector_store %arg8[%c0_17, %c0_18], %19 {strides = array<i32>} : memref<8x2xf32, #tpu.memory_space<vmem>>, vector<8x2xf32>,
    return
  }
  func.func @transform_0(%arg0: i32) -> (i32, i32) {
    %c0_i32 = arith.constant 0 : i32
    %c0_i32_0 = arith.constant 0 : i32
    return %arg0, %c0_i32 : i32, i32
  }
  func.func @transform_1(%arg0: i32) -> (i32, i32) {
    %c0_i32 = arith.constant 0 : i32
    %c0_i32_0 = arith.constant 0 : i32
    %c0_i32_1 = arith.constant 0 : i32
    return %c0_i32, %c0_i32_0 : i32, i32
  }
  func.func @transform_2(%arg0: i32) -> (i32, i32) {
    %c0_i32 = arith.constant 0 : i32
    %c0_i32_0 = arith.constant 0 : i32
    %c0_i32_1 = arith.constant 0 : i32
    return %c0_i32, %c0_i32_0 : i32, i32
  }
  func.func @transform_3(%arg0: i32) -> (i32, i32) {
    %c0_i32 = arith.constant 0 : i32
    %c0_i32_0 = arith.constant 0 : i32
    %c0_i32_1 = arith.constant 0 : i32
    return %c0_i32, %c0_i32_0 : i32, i32
  }
  func.func @transform_4(%arg0: i32) -> (i32, i32) {
    %c0_i32 = arith.constant 0 : i32
    %c0_i32_0 = arith.constant 0 : i32
    %c0_i32_1 = arith.constant 0 : i32
    return %c0_i32, %c0_i32_0 : i32, i32
  }
  func.func @transform_5(%arg0: i32) -> (i32, i32) {
    %c0_i32 = arith.constant 0 : i32
    %c0_i32_0 = arith.constant 0 : i32
    %c0_i32_1 = arith.constant 0 : i32
    return %c0_i32, %c0_i32_0 : i32, i32
  }
  func.func @transform_6(%arg0: i32) -> (i32, i32) {
    %c0_i32 = arith.constant 0 : i32
    %c0_i32_0 = arith.constant 0 : i32
    %c0_i32_1 = arith.constant 0 : i32
    return %c0_i32, %c0_i32_0 : i32, i32
  }
  func.func @transform_7(%arg0: i32) -> (i32, i32) {
    %c0_i32 = arith.constant 0 : i32
    %c0_i32_0 = arith.constant 0 : i32
    return %arg0, %c0_i32 : i32, i32
  }
}

</mosaic_0001>

<llo_original>
// kernel: mlp_g_forward.1
$region0: #{mlp_g_forward.1}
  #allocation0 [shape = 'u32[]', space=smem, size = 0x4, offset = 0x4, fixed_abs, tag = 'smem constant byte address 0x4 - core index']
  #allocation1 [shape = 'u32[72,128]{1,0:T(1,128)}', space=vmem, size = 0x9000, scoped, tag = 'internal scratch']
  %s0 = inlined_call_operand.hbm [shape: f32[16,256], index: 0, kind: input, shape index: {}]
  %s1 = inlined_call_operand.hbm [shape: f32[256,128], index: 1, kind: input, shape index: {}]
  %s2 = inlined_call_operand.vmem [shape: f32[1,128], index: 2, kind: input, shape index: {}]
  %s3 = inlined_call_operand.vmem [shape: f32[128,128], index: 3, kind: input, shape index: {}]
  %s4 = inlined_call_operand.vmem [shape: f32[1,128], index: 4, kind: input, shape index: {}]
  %s5 = inlined_call_operand.vmem [shape: f32[128,2], index: 5, kind: input, shape index: {}]
  %s6 = inlined_call_operand.vmem [shape: f32[1,2], index: 6, kind: input, shape index: {}]
  %s7 = inlined_call_operand.vmem [shape: f32[16,2], index: 7, kind: output, shape index: {}]
  %s8 = sld [smem:[#allocation0]]
  $region69: #{mlp_g_forward.1} parent=0
    _
  %s10 = ssub.s32 1, %s8
  %s11 = scalar_select 0, %s10, %s8
  $region1: #{mlp_g_forward.1} parent=0
    #allocation2 [shape = 'u8[16384]{0}', space=vmem, size = 0x4000, scoped, tag = 'input window, operand 0']
    #allocation3 [shape = 's32[2]{0}', space=sflag, size = 0x8, scoped, tag = 'scoped memory for mlp_g_forward.1']
    #allocation4 [shape = 'u8[131072]{0}', space=vmem, size = 0x20000, scoped, tag = 'input window, operand 1, single buffered']
    #allocation5 [shape = 's32[1]{0}', space=sflag, size = 0x4, scoped, tag = 'scoped memory for mlp_g_forward.1']
    %12 = vsyncpa [#allocation3], 0
    %s13 = scalar_lea.sflag [#allocation3], 1
    %14 = vsyncpa %s13, 0
    %15 = vsyncpa [#allocation5], 0
    loop: start=0, step=1, limit=4
    $region2: #{mlp_g_forward.1} parent=1 // loop_pre_header
      _
    $region3: #{mlp_g_forward.1} parent=1 // loop_header
      %s17 = sphi 0, %s21
      %p18 = scmp.ge.s32.totalorder %s17, 4
      %s27 = sphi 0, %s29
      %s30 = sphi 0, %s27
      %s31 = sphi 0, %s30
      %s47 = sphi 0, %s31
      %s51 = sphi 0, %s51
      %s53 = sphi 0, %s51
      %s54 = sphi 0, %s53
      %s68 = sphi 0, %s54
      %s72 = sphi 0, %s72
      %s74 = sphi 0, %s72
      %s75 = sphi 0, %s74
      %s89 = sphi 0, %s75
      %s93 = sphi 0, %s93
      %s95 = sphi 0, %s93
      %s96 = sphi 0, %s95
      %s110 = sphi 0, %s96
      %s114 = sphi 0, %s114
      %s116 = sphi 0, %s114
      %s117 = sphi 0, %s116
      %s131 = sphi 0, %s117
      %s135 = sphi 0, %s135
      %s137 = sphi 0, %s135
      %s138 = sphi 0, %s137
      %s152 = sphi 0, %s138
      %s156 = sphi 0, %s156
      %s158 = sphi 0, %s156
      %s159 = sphi 0, %s158
      %s173 = sphi 0, %s159
      %s179 = sphi 0, %s181
      %s182 = sphi 0, %s179
      %s183 = sphi 0, %s182
      %s199 = sphi 0, %s183
    $region4: #{mlp_g_forward.1} parent=1 // loop_header_branch
      %20 = sbr.rel (%p18) target = $region8
    $region5: #{mlp_g_forward.1} parent=1 // loop_body
      %s22 = ssub.s32 %s17, 1
      %s23 = ssub.s32 %s17, 2
      %s24 = sadd.s32 %s17, 1
      %s25 = ssub.s32 %s17, %s24
      %p26 = scmp.eq.s32.totalorder %s25, 0
      %s28 = sadd.s32 %s27, 1
      %s29 = scalar_select %p26, %s27, %s28
      %p32 = pneg %p26
      %p33 = scmp.eq.s32.totalorder %s17, 1
      %p34 = por %p32, %p33
      %p35 = scmp.ne.s32.totalorder %s27, %s30
      %p36 = scmp.eq.s32.totalorder %s17, 0
      %p37 = por %p35, %p36
      %p38 = scmp.ne.s32.totalorder %s27, %s30
      %p39 = scmp.eq.s32.totalorder %s22, 1
      %p40 = por %p38, %p39
      %p41 = scmp.ne.s32.totalorder %s30, %s31
      %p42 = scmp.eq.s32.totalorder %s22, 0
      %p43 = por %p41, %p42
      %p44 = scmp.ne.s32.totalorder %s30, %s31
      %p45 = scmp.eq.s32.totalorder %s23, 1
      %p46 = por %p44, %p45
      %p48 = scmp.ne.s32.totalorder %s31, %s47
      %p49 = scmp.eq.s32.totalorder %s23, 0
      %p50 = por %p48, %p49
      %s52 = sadd.s32 %s51, 1
      %p55 = scmp.eq.s32.totalorder %s17, 1
      %p56 = scmp.ne.s32.totalorder %s51, %s53
      %p57 = scmp.eq.s32.totalorder %s17, 0
      %p58 = por %p56, %p57
      %p59 = scmp.ne.s32.totalorder %s51, %s53
      %p60 = scmp.eq.s32.totalorder %s22, 1
      %p61 = por %p59, %p60
      %p62 = scmp.ne.s32.totalorder %s53, %s54
      %p63 = scmp.eq.s32.totalorder %s22, 0
      %p64 = por %p62, %p63
      %p65 = scmp.ne.s32.totalorder %s53, %s54
      %p66 = scmp.eq.s32.totalorder %s23, 1
      %p67 = por %p65, %p66
      %p69 = scmp.ne.s32.totalorder %s54, %s68
      %p70 = scmp.eq.s32.totalorder %s23, 0
      %p71 = por %p69, %p70
      %s73 = sadd.s32 %s72, 1
      %p76 = scmp.eq.s32.totalorder %s17, 1
      %p77 = scmp.ne.s32.totalorder %s72, %s74
      %p78 = scmp.eq.s32.totalorder %s17, 0
      %p79 = por %p77, %p78
      %p80 = scmp.ne.s32.totalorder %s72, %s74
      %p81 = scmp.eq.s32.totalorder %s22, 1
      %p82 = por %p80, %p81
      %p83 = scmp.ne.s32.totalorder %s74, %s75
      %p84 = scmp.eq.s32.totalorder %s22, 0
      %p85 = por %p83, %p84
      %p86 = scmp.ne.s32.totalorder %s74, %s75
      %p87 = scmp.eq.s32.totalorder %s23, 1
      %p88 = por %p86, %p87
      %p90 = scmp.ne.s32.totalorder %s75, %s89
      %p91 = scmp.eq.s32.totalorder %s23, 0
      %p92 = por %p90, %p91
      %s94 = sadd.s32 %s93, 1
      %p97 = scmp.eq.s32.totalorder %s17, 1
      %p98 = scmp.ne.s32.totalorder %s93, %s95
      %p99 = scmp.eq.s32.totalorder %s17, 0
      %p100 = por %p98, %p99
      %p101 = scmp.ne.s32.totalorder %s93, %s95
      %p102 = scmp.eq.s32.totalorder %s22, 1
      %p103 = por %p101, %p102
      %p104 = scmp.ne.s32.totalorder %s95, %s96
      %p105 = scmp.eq.s32.totalorder %s22, 0
      %p106 = por %p104, %p105
      %p107 = scmp.ne.s32.totalorder %s95, %s96
      %p108 = scmp.eq.s32.totalorder %s23, 1
      %p109 = por %p107, %p108
      %p111 = scmp.ne.s32.totalorder %s96, %s110
      %p112 = scmp.eq.s32.totalorder %s23, 0
      %p113 = por %p111, %p112
      %s115 = sadd.s32 %s114, 1
      %p118 = scmp.eq.s32.totalorder %s17, 1
      %p119 = scmp.ne.s32.totalorder %s114, %s116
      %p120 = scmp.eq.s32.totalorder %s17, 0
      %p121 = por %p119, %p120
      %p122 = scmp.ne.s32.totalorder %s114, %s116
      %p123 = scmp.eq.s32.totalorder %s22, 1
      %p124 = por %p122, %p123
      %p125 = scmp.ne.s32.totalorder %s116, %s117
      %p126 = scmp.eq.s32.totalorder %s22, 0
      %p127 = por %p125, %p126
      %p128 = scmp.ne.s32.totalorder %s116, %s117
      %p129 = scmp.eq.s32.totalorder %s23, 1
      %p130 = por %p128, %p129
      %p132 = scmp.ne.s32.totalorder %s117, %s131
      %p133 = scmp.eq.s32.totalorder %s23, 0
      %p134 = por %p132, %p133
      %s136 = sadd.s32 %s135, 1
      %p139 = scmp.eq.s32.totalorder %s17, 1
      %p140 = scmp.ne.s32.totalorder %s135, %s137
      %p141 = scmp.eq.s32.totalorder %s17, 0
      %p142 = por %p140, %p141
      %p143 = scmp.ne.s32.totalorder %s135, %s137
      %p144 = scmp.eq.s32.totalorder %s22, 1
      %p145 = por %p143, %p144
      %p146 = scmp.ne.s32.totalorder %s137, %s138
      %p147 = scmp.eq.s32.totalorder %s22, 0
      %p148 = por %p146, %p147
      %p149 = scmp.ne.s32.totalorder %s137, %s138
      %p150 = scmp.eq.s32.totalorder %s23, 1
      %p151 = por %p149, %p150
      %p153 = scmp.ne.s32.totalorder %s138, %s152
      %p154 = scmp.eq.s32.totalorder %s23, 0
      %p155 = por %p153, %p154
      %s157 = sadd.s32 %s156, 1
      %p160 = scmp.eq.s32.totalorder %s17, 1
      %p161 = scmp.ne.s32.totalorder %s156, %s158
      %p162 = scmp.eq.s32.totalorder %s17, 0
      %p163 = por %p161, %p162
      %p164 = scmp.ne.s32.totalorder %s156, %s158
      %p165 = scmp.eq.s32.totalorder %s22, 1
      %p166 = por %p164, %p165
      %p167 = scmp.ne.s32.totalorder %s158, %s159
      %p168 = scmp.eq.s32.totalorder %s22, 0
      %p169 = por %p167, %p168
      %p170 = scmp.ne.s32.totalorder %s158, %s159
      %p171 = scmp.eq.s32.totalorder %s23, 1
      %p172 = por %p170, %p171
      %p174 = scmp.ne.s32.totalorder %s159, %s173
      %p175 = scmp.eq.s32.totalorder %s23, 0
      %p176 = por %p174, %p175
      %s177 = ssub.s32 %s17, %s24
      %p178 = scmp.eq.s32.totalorder %s177, 0
      %s180 = sadd.s32 %s179, 1
      %s181 = scalar_select %p178, %s179, %s180
      %p184 = pneg %p178
      %p185 = scmp.eq.s32.totalorder %s17, 1
      %p186 = por %p184, %p185
      %p187 = scmp.ne.s32.totalorder %s179, %s182
      %p188 = scmp.eq.s32.totalorder %s17, 0
      %p189 = por %p187, %p188
      %p190 = scmp.ne.s32.totalorder %s179, %s182
      %p191 = scmp.eq.s32.totalorder %s22, 1
      %p192 = por %p190, %p191
      %p193 = scmp.ne.s32.totalorder %s182, %s183
      %p194 = scmp.eq.s32.totalorder %s22, 0
      %p195 = por %p193, %p194
      %p196 = scmp.ne.s32.totalorder %s182, %s183
      %p197 = scmp.eq.s32.totalorder %s23, 1
      %p198 = por %p196, %p197
      %p200 = scmp.ne.s32.totalorder %s183, %s199
      %p201 = scmp.eq.s32.totalorder %s23, 0
      %p202 = por %p200, %p201
      %p203 = scmp.le.s32.totalorder 1, %s17
      %p204 = scmp.lt.s32.totalorder %s17, 3
      %p205 = pnand %p203, %p204
      %p206 = pneg %p205
      // Predicated region
      $region9: #{mlp_g_forward.1} parent=5 // pred_check
        _
      $region10: #{mlp_g_forward.1} parent=5 // pred_check_branch
        %208 = sbr.rel (%p205) target = $region12
      $region11: #{mlp_g_forward.1} parent=5 // pred_region
        %s209 = ssub.s32 %s17, 1
        // Predicated region
        $region13: #{mlp_g_forward.1} parent=11 // pred_check
          %p210 = pneg %p64
        $region14: #{mlp_g_forward.1} parent=11 // pred_check_branch
          %212 = sbr.rel (%p210) target = $region16
        $region15: #{mlp_g_forward.1} parent=11 // pred_region
          %214 = vsyncadd [#allocation5], 0
          %s215 = sshll.u32 %s1, 4
          %s216 = int_to_ptr.hbm [resolvable:$true] %s215
          %s217 = sshll.u32 [#allocation4], 4
          %s218 = int_to_ptr.vmem [resolvable:$true] %s217
          %223 = dma.hbm_to_vmem [thread:$0]  %s216, 4096, %s218, [#allocation5], 128, 128, 8
        $region16: #{mlp_g_forward.1} parent=11 // pred_fallthru
          _
        // Predicated region
        $region17: #{mlp_g_forward.1} parent=11 // pred_check
          %p224 = pneg %p85
        $region18: #{mlp_g_forward.1} parent=11 // pred_check_branch
          %226 = sbr.rel (%p224) target = $region20
        $region19: #{mlp_g_forward.1} parent=11 // pred_region
          _
        $region20: #{mlp_g_forward.1} parent=11 // pred_fallthru
          _
        // Predicated region
        $region21: #{mlp_g_forward.1} parent=11 // pred_check
          %p227 = pneg %p106
        $region22: #{mlp_g_forward.1} parent=11 // pred_check_branch
          %229 = sbr.rel (%p227) target = $region24
        $region23: #{mlp_g_forward.1} parent=11 // pred_region
          _
        $region24: #{mlp_g_forward.1} parent=11 // pred_fallthru
          _
        // Predicated region
        $region25: #{mlp_g_forward.1} parent=11 // pred_check
          %p230 = pneg %p127
        $region26: #{mlp_g_forward.1} parent=11 // pred_check_branch
          %232 = sbr.rel (%p230) target = $region28
        $region27: #{mlp_g_forward.1} parent=11 // pred_region
          _
        $region28: #{mlp_g_forward.1} parent=11 // pred_fallthru
          _
        // Predicated region
        $region29: #{mlp_g_forward.1} parent=11 // pred_check
          %p233 = pneg %p148
        $region30: #{mlp_g_forward.1} parent=11 // pred_check_branch
          %235 = sbr.rel (%p233) target = $region32
        $region31: #{mlp_g_forward.1} parent=11 // pred_region
          _
        $region32: #{mlp_g_forward.1} parent=11 // pred_fallthru
          _
        // Predicated region
        $region33: #{mlp_g_forward.1} parent=11 // pred_check
          %p236 = pneg %p169
        $region34: #{mlp_g_forward.1} parent=11 // pred_check_branch
          %238 = sbr.rel (%p236) target = $region36
        $region35: #{mlp_g_forward.1} parent=11 // pred_region
          _
        $region36: #{mlp_g_forward.1} parent=11 // pred_fallthru
          _
      $region12: #{mlp_g_forward.1} parent=5 // pred_fallthru
        _
      %p239 = scmp.lt.s32.totalorder %s17, 2
      // Predicated region
      $region37: #{mlp_g_forward.1} parent=5 // pred_check
        %p240 = pneg %p239
      $region38: #{mlp_g_forward.1} parent=5 // pred_check_branch
        %242 = sbr.rel (%p240) target = $region40
      $region39: #{mlp_g_forward.1} parent=5 // pred_region
        // Predicated region
        $region41: #{mlp_g_forward.1} parent=39 // pred_check
          %p243 = pneg %p37
        $region42: #{mlp_g_forward.1} parent=39 // pred_check_branch
          %245 = sbr.rel (%p243) target = $region44
        $region43: #{mlp_g_forward.1} parent=39 // pred_region
          %s246 = sand.u32 %s27, 1
          %s247 = scalar_lea.sflag [#allocation3], %s246
          %s248 = sand.u32 %s27, 1
          %s249 = smul.addr %s248, 16
          %s250 = scalar_lea.vmem [#allocation2], %s249
          %252 = vsyncadd %s247, 0
          %s253 = smul.addr %s17, 2
          %s254 = smul.addr %s253, 8
          %s255 = scalar_lea.hbm %s0, %s254
          %s257 = sshll.u32 %s255, 4
          %s258 = int_to_ptr.hbm [resolvable:$true] %s257
          %s259 = sshll.u32 %s250, 4
          %s260 = int_to_ptr.vmem [resolvable:$true] %s259
          %262 = dma.hbm_to_vmem [thread:$0]  %s258, 256, %s260, %s247
        $region44: #{mlp_g_forward.1} parent=39 // pred_fallthru
          _
      $region40: #{mlp_g_forward.1} parent=5 // pred_fallthru
        _
      %p263 = scmp.le.s32.totalorder 1, %s17
      %p264 = scmp.lt.s32.totalorder %s17, 3
      %p265 = pnand %p263, %p264
      %p266 = pneg %p265
      // Predicated region
      $region45: #{mlp_g_forward.1} parent=5 // pred_check
        _
      $region46: #{mlp_g_forward.1} parent=5 // pred_check_branch
        %268 = sbr.rel (%p265) target = $region48
      $region47: #{mlp_g_forward.1} parent=5 // pred_region
        %s269 = ssub.s32 %s17, 1
        %s270 = sand.u32 %s30, 1
        %s271 = scalar_lea.sflag [#allocation3], %s270
        %s272 = sand.u32 %s30, 1
        %s273 = smul.addr %s272, 16
        %s274 = scalar_lea.vmem [#allocation2], %s273
        // Predicated region
        $region49: #{mlp_g_forward.1} parent=47 // pred_check
          %p275 = pneg %p43
        $region50: #{mlp_g_forward.1} parent=47 // pred_check_branch
          %277 = sbr.rel (%p275) target = $region52
        $region51: #{mlp_g_forward.1} parent=47 // pred_region
          %279 = dma.done %s271, 256
        $region52: #{mlp_g_forward.1} parent=47 // pred_fallthru
          _
        // Predicated region
        $region53: #{mlp_g_forward.1} parent=47 // pred_check
          %p280 = pneg %p64
        $region54: #{mlp_g_forward.1} parent=47 // pred_check_branch
          %282 = sbr.rel (%p280) target = $region56
        $region55: #{mlp_g_forward.1} parent=47 // pred_region
          %284 = dma.done [#allocation5], 4096
        $region56: #{mlp_g_forward.1} parent=47 // pred_fallthru
          _
        %s285 = sand.u32 %s30, 1
        %s286 = scalar_lea.sflag [#allocation3], %s285
        %s287 = sand.u32 %s30, 1
        %s288 = smul.addr %s287, 16
        %s289 = scalar_lea.vmem [#allocation2], %s288
        %p290 = pneg %p43
        %p291 = pneg %p40
        %p292 = pneg %p64
        %p293 = pneg %p61
        %p294 = pneg %p85
        %p295 = pneg %p82
        %p296 = pneg %p106
        %p297 = pneg %p103
        %p298 = pneg %p127
        %p299 = pneg %p124
        %p300 = pneg %p148
        %p301 = pneg %p145
        %p302 = pneg %p169
        %p303 = pneg %p166
        %p304 = pneg %p195
        %p305 = pneg %p192
        %p306 = scmp.lt.s32.totalorder %s22, 1
        %s307 = scalar_select %p306, %s22, 1
        %s308 = smul.addr %s307, 8
        %s309 = scalar_lea.vmem %s7, %s308
        %p310 = scmp.lt.s32.totalorder %s22, 1
        %s311 = scalar_select %p310, %s22, 1
        %s312 = smul.addr %s311, 8
        %s313 = scalar_lea.vmem %s7, %s312
        %v314 = vld [vmem:[%s274] sm:$0xff]
        %v315 = vld [vmem:[%s274 + $0x8] sm:$0xff]
        %v316 = vld [vmem:[#allocation4] sm:$0xff]
        %v317 = vld [vmem:[#allocation4 + $0x8] sm:$0xff]
        %v318 = vld [vmem:[#allocation4 + $0x10] sm:$0xff]
        %v319 = vld [vmem:[#allocation4 + $0x18] sm:$0xff]
        %v320 = vld [vmem:[#allocation4 + $0x20] sm:$0xff]
        %v321 = vld [vmem:[#allocation4 + $0x28] sm:$0xff]
        %v322 = vld [vmem:[#allocation4 + $0x30] sm:$0xff]
        %v323 = vld [vmem:[#allocation4 + $0x38] sm:$0xff]
        %v324 = vld [vmem:[#allocation4 + $0x40] sm:$0xff]
        %v325 = vld [vmem:[#allocation4 + $0x48] sm:$0xff]
        %v326 = vld [vmem:[#allocation4 + $0x50] sm:$0xff]
        %v327 = vld [vmem:[#allocation4 + $0x58] sm:$0xff]
        %v328 = vld [vmem:[#allocation4 + $0x60] sm:$0xff]
        %v329 = vld [vmem:[#allocation4 + $0x68] sm:$0xff]
        %v330 = vld [vmem:[#allocation4 + $0x70] sm:$0xff]
        %v331 = vld [vmem:[#allocation4 + $0x78] sm:$0xff]
        %v332 = vld [vmem:[#allocation4 + $0x80] sm:$0xff]
        %v333 = vld [vmem:[#allocation4 + $0x88] sm:$0xff]
        %v334 = vld [vmem:[#allocation4 + $0x90] sm:$0xff]
        %v335 = vld [vmem:[#allocation4 + $0x98] sm:$0xff]
        %v336 = vld [vmem:[#allocation4 + $0xa0] sm:$0xff]
        %v337 = vld [vmem:[#allocation4 + $0xa8] sm:$0xff]
        %v338 = vld [vmem:[#allocation4 + $0xb0] sm:$0xff]
        %v339 = vld [vmem:[#allocation4 + $0xb8] sm:$0xff]
        %v340 = vld [vmem:[#allocation4 + $0xc0] sm:$0xff]
        %v341 = vld [vmem:[#allocation4 + $0xc8] sm:$0xff]
        %v342 = vld [vmem:[#allocation4 + $0xd0] sm:$0xff]
        %v343 = vld [vmem:[#allocation4 + $0xd8] sm:$0xff]
        %v344 = vld [vmem:[#allocation4 + $0xe0] sm:$0xff]
        %v345 = vld [vmem:[#allocation4 + $0xe8] sm:$0xff]
        %v346 = vld [vmem:[#allocation4 + $0xf0] sm:$0xff]
        %v347 = vld [vmem:[#allocation4 + $0xf8] sm:$0xff]
        %v348 = vld [vmem:[%s2] sm:$0x1]
        %v350 = vperm.slane %v348, 0
        %352 = vmatpush.msra.mxu0 %v331
        %353 = vmatpush.msra.mxu0 %v330
        %354 = vmatpush.msra.mxu0 %v329
        %355 = vmatpush.msra.mxu0 %v328
        %356 = vmatpush.msra.mxu0 %v327
        %357 = vmatpush.msra.mxu0 %v326
        %358 = vmatpush.msra.mxu0 %v325
        %359 = vmatpush.msra.mxu0 %v324
        %360 = vmatpush.msra.mxu0 %v323
        %361 = vmatpush.msra.mxu0 %v322
        %362 = vmatpush.msra.mxu0 %v321
        %363 = vmatpush.msra.mxu0 %v320
        %364 = vmatpush.msra.mxu0 %v319
        %365 = vmatpush.msra.mxu0 %v318
        %366 = vmatpush.msra.mxu0 %v317
        %367 = vmatpush.msra.mxu0 %v316
        %368 = vmatmul.f32.gmra.mxu0 %v314
        %v369 = vpop.f32.mrf.mxu0
        %v370 = vadd.f32 %v350, %v369
        %371 = vdwg.mxu0
        %372 = vmatpush.msra.mxu0 %v347
        %373 = vmatpush.msra.mxu0 %v346
        %374 = vmatpush.msra.mxu0 %v345
        %375 = vmatpush.msra.mxu0 %v344
        %376 = vmatpush.msra.mxu0 %v343
        %377 = vmatpush.msra.mxu0 %v342
        %378 = vmatpush.msra.mxu0 %v341
        %379 = vmatpush.msra.mxu0 %v340
        %380 = vmatpush.msra.mxu0 %v339
        %381 = vmatpush.msra.mxu0 %v338
        %382 = vmatpush.msra.mxu0 %v337
        %383 = vmatpush.msra.mxu0 %v336
        %384 = vmatpush.msra.mxu0 %v335
        %385 = vmatpush.msra.mxu0 %v334
        %386 = vmatpush.msra.mxu0 %v333
        %387 = vmatpush.msra.mxu0 %v332
        %388 = vmatmul.f32.gmra.mxu0 %v315
        %v389 = vpop.f32.mrf.mxu0
        %v390 = vadd.f32 %v370, %v389
        %391 = vdwg.mxu0
        %v392 = vmax.f32 %v390, 0.0
        %v393 = vld [vmem:[%s3] sm:$0xff]
        %v394 = vld [vmem:[%s3 + $0x8] sm:$0xff]
        %v395 = vld [vmem:[%s3 + $0x10] sm:$0xff]
        %v396 = vld [vmem:[%s3 + $0x18] sm:$0xff]
        %v397 = vld [vmem:[%s3 + $0x20] sm:$0xff]
        %v398 = vld [vmem:[%s3 + $0x28] sm:$0xff]
        %v399 = vld [vmem:[%s3 + $0x30] sm:$0xff]
        %v400 = vld [vmem:[%s3 + $0x38] sm:$0xff]
        %v401 = vld [vmem:[%s3 + $0x40] sm:$0xff]
        %v402 = vld [vmem:[%s3 + $0x48] sm:$0xff]
        %v403 = vld [vmem:[%s3 + $0x50] sm:$0xff]
        %v404 = vld [vmem:[%s3 + $0x58] sm:$0xff]
        %v405 = vld [vmem:[%s3 + $0x60] sm:$0xff]
        %v406 = vld [vmem:[%s3 + $0x68] sm:$0xff]
        %v407 = vld [vmem:[%s3 + $0x70] sm:$0xff]
        %v408 = vld [vmem:[%s3 + $0x78] sm:$0xff]
        %v409 = vld [vmem:[%s4] sm:$0x1]
        %v411 = vperm.slane %v409, 0
        %413 = vmatpush.msra.mxu0 %v408
        %414 = vmatpush.msra.mxu0 %v407
        %415 = vmatpush.msra.mxu0 %v406
        %416 = vmatpush.msra.mxu0 %v405
        %417 = vmatpush.msra.mxu0 %v404
        %418 = vmatpush.msra.mxu0 %v403
        %419 = vmatpush.msra.mxu0 %v402
        %420 = vmatpush.msra.mxu0 %v401
        %421 = vmatpush.msra.mxu0 %v400
        %422 = vmatpush.msra.mxu0 %v399
        %423 = vmatpush.msra.mxu0 %v398
        %424 = vmatpush.msra.mxu0 %v397
        %425 = vmatpush.msra.mxu0 %v396
        %426 = vmatpush.msra.mxu0 %v395
        %427 = vmatpush.msra.mxu0 %v394
        %428 = vmatpush.msra.mxu0 %v393
        %429 = vmatmul.f32.gmra.mxu0 %v392
        %v430 = vpop.f32.mrf.mxu0
        %v431 = vadd.f32 %v411, %v430
        %432 = vdwg.mxu0
        %v433 = vmax.f32 %v431, 0.0
        %v434 = vld [vmem:[%s5] sm:$0xff]
        %v435 = vld [vmem:[%s5 + $0x8] sm:$0xff]
        %v436 = vld [vmem:[%s5 + $0x10] sm:$0xff]
        %v437 = vld [vmem:[%s5 + $0x18] sm:$0xff]
        %v438 = vld [vmem:[%s5 + $0x20] sm:$0xff]
        %v439 = vld [vmem:[%s5 + $0x28] sm:$0xff]
        %v440 = vld [vmem:[%s5 + $0x30] sm:$0xff]
        %v441 = vld [vmem:[%s5 + $0x38] sm:$0xff]
        %v442 = vld [vmem:[%s5 + $0x40] sm:$0xff]
        %v443 = vld [vmem:[%s5 + $0x48] sm:$0xff]
        %v444 = vld [vmem:[%s5 + $0x50] sm:$0xff]
        %v445 = vld [vmem:[%s5 + $0x58] sm:$0xff]
        %v446 = vld [vmem:[%s5 + $0x60] sm:$0xff]
        %v447 = vld [vmem:[%s5 + $0x68] sm:$0xff]
        %v448 = vld [vmem:[%s5 + $0x70] sm:$0xff]
        %v449 = vld [vmem:[%s5 + $0x78] sm:$0xff]
        %v450 = vld [vmem:[%s6] sm:$0x1]
        %v452 = vperm.slane %v450, 0
        %454 = vmatpush.msra.mxu0 %v449
        %455 = vmatpush.msra.mxu0 %v448
        %456 = vmatpush.msra.mxu0 %v447
        %457 = vmatpush.msra.mxu0 %v446
        %458 = vmatpush.msra.mxu0 %v445
        %459 = vmatpush.msra.mxu0 %v444
        %460 = vmatpush.msra.mxu0 %v443
        %461 = vmatpush.msra.mxu0 %v442
        %462 = vmatpush.msra.mxu0 %v441
        %463 = vmatpush.msra.mxu0 %v440
        %464 = vmatpush.msra.mxu0 %v439
        %465 = vmatpush.msra.mxu0 %v438
        %466 = vmatpush.msra.mxu0 %v437
        %467 = vmatpush.msra.mxu0 %v436
        %468 = vmatpush.msra.mxu0 %v435
        %469 = vmatpush.msra.mxu0 %v434
        %470 = vmatmul.f32.gmra.mxu0 %v433
        %v471 = vpop.f32.mrf.mxu0
        %v472 = vadd.f32 %v452, %v471
        %473 = vdwg.mxu0
        %vm474 = vcmask 15360
        %475 = vst.msk [vmem:[%s313] sm:$0xff] %vm474, %v472
        %p476 = scmp.lt.s32.totalorder %s22, 1
        %s477 = scalar_select %p476, %s22, 1
        %s478 = smul.addr %s477, 8
        %s479 = scalar_lea.vmem %s7, %s478
        // Predicated region
        $region57: #{mlp_g_forward.1} parent=47 // pred_check
          %p480 = pneg %p192
        $region58: #{mlp_g_forward.1} parent=47 // pred_check_branch
          %482 = sbr.rel (%p480) target = $region60
        $region59: #{mlp_g_forward.1} parent=47 // pred_region
          _
        $region60: #{mlp_g_forward.1} parent=47 // pred_fallthru
          _
      $region48: #{mlp_g_forward.1} parent=5 // pred_fallthru
        _
      %p483 = scmp.le.s32.totalorder 2, %s17
      // Predicated region
      $region61: #{mlp_g_forward.1} parent=5 // pred_check
        %p484 = pneg %p483
      $region62: #{mlp_g_forward.1} parent=5 // pred_check_branch
        %486 = sbr.rel (%p484) target = $region64
      $region63: #{mlp_g_forward.1} parent=5 // pred_region
        %s487 = ssub.s32 %s17, 2
        // Predicated region
        $region65: #{mlp_g_forward.1} parent=63 // pred_check
          %p488 = pneg %p198
        $region66: #{mlp_g_forward.1} parent=63 // pred_check_branch
          %490 = sbr.rel (%p488) target = $region68
        $region67: #{mlp_g_forward.1} parent=63 // pred_region
          %p491 = scmp.lt.s32.totalorder %s23, 1
          %s492 = scalar_select %p491, %s23, 1
          %s493 = smul.addr %s492, 8
          %s494 = scalar_lea.vmem %s7, %s493
        $region68: #{mlp_g_forward.1} parent=63 // pred_fallthru
          _
      $region64: #{mlp_g_forward.1} parent=5 // pred_fallthru
        _
    $region6: #{mlp_g_forward.1} parent=1 // loop_footer
      %s21 = sadd.s32 1, %s17
    $region7: #{mlp_g_forward.1} parent=1 // loop_footer_branch
      %16 = sbr.rel target = $region3
    $region8: #{mlp_g_forward.1} parent=1 // loop_exit
      _
    %495 = vsyncpa [#allocation3], 1
    %s496 = scalar_lea.sflag [#allocation3], 1
    %497 = vsyncpa %s496, 1
    %498 = vsyncpa [#allocation5], 1

</llo_original>
